<compile_context>
chip_gen: v5e
topology: v5e:2x2
jax: 0.10.0
libtpu: 0.0.40
codegen_flags: <defaults>
</compile_context>

<pallas_src>
import jax
import jax.numpy as jnp
from jax.experimental import pallas as pl
from jax.experimental.pallas import tpu as pltpu

_PAIRDIST_EPS = 1e-6          # torch.nn.PairwiseDistance default eps
_NUM_CORE_SPLITS = 2          # leading "parallel" axis (v7x megacore; loop of 2 elsewhere)


def _cdiv(a, b):
    return (a + b - 1) // b


def _round_up(x, m):
    return _cdiv(x, m) * m


def _vmem_limit_bytes():
    # Generation-aware scoped-VMEM limit: ~3/4 of physical, capped at 96 MiB.
    # (v5e/v6e: 128 MiB physical -> 96 MiB; v7x: 64 MiB physical -> 48 MiB.)
    try:
        cap = int(pltpu.get_tpu_info().vmem_capacity_bytes)
    except Exception:
        cap = 64 << 20  # smallest per-TC VMEM (v7x) as a safe fallback
    return int(min(cap * 3 // 4, 96 << 20))


def _make_loss_kernel(batch, tile_b, steps_per_core):
    def kernel(a_ref, p_ref, n_ref, dis_ref, out_ref, acc_ref):
        core = pl.program_id(0)   # parallel axis (2-way split of the batch)
        step = pl.program_id(1)   # reduction axis over this core's row blocks

        @pl.when(step == 0)
        def _init():
            acc_ref[0] = jnp.float32(0.0)

        # Stream native dtype from HBM; do all math in f32.
        a = a_ref[...].astype(jnp.float32)      # (tile_b, D)
        p = p_ref[...].astype(jnp.float32)
        n = n_ref[...].astype(jnp.float32)
        dis = dis_ref[...].astype(jnp.float32)  # (tile_b, 2) ground-truth distances

        # torch PairwiseDistance(p=2): ||x - y + eps||_2 along the embedding dim.
        d_ap = jnp.sqrt(jnp.sum((a - p + _PAIRDIST_EPS) ** 2, axis=-1, keepdims=True))
        d_an = jnp.sqrt(jnp.sum((a - n + _PAIRDIST_EPS) ** 2, axis=-1, keepdims=True))
        v_ap = jnp.exp(-d_ap)                   # (tile_b, 1) — EUP
        v_an = jnp.exp(-d_an)
        t_ap = jnp.exp(-dis[:, 0:1])            # D_ap
        t_an = jnp.exp(-dis[:, 1:2])            # D_an

        loss = t_ap * (t_ap - v_ap) ** 2 + t_an * (t_an - v_an) ** 2  # (tile_b, 1)

        # Mask rows past the true batch (ragged tail / core-split overshoot).
        # Logical (unclamped) row index: select is safe even if tail data is NaN.
        row0 = (core * steps_per_core + step) * tile_b
        rows = row0 + jax.lax.broadcasted_iota(jnp.int32, (tile_b, 1), 0)
        loss = jnp.where(rows < batch, loss, 0.0)

        # Per-step cross-lane reduce (XLU, free when HBM-bound) into SMEM scalar.
        acc_ref[0] += jnp.sum(loss)

        @pl.when(step == steps_per_core - 1)
        def _finalize():
            out_ref[...] = jnp.full(out_ref.shape, acc_ref[0], out_ref.dtype)

    return kernel


def loss_fun(embedding_a, embedding_p, embedding_n, triplets_dis, *, tile_b=None):
    """Mean batch triplet loss (scalar float32), lorentz == 0 path."""
    assert embedding_a.shape == embedding_p.shape == embedding_n.shape
    batch, dim = embedding_a.shape
    assert triplets_dis.shape == (batch, 2)

    # Keep native dtypes (e.g. bf16) — no wrapper-side cast / HBM copy.
    a = jnp.asarray(embedding_a)
    p = jnp.asarray(embedding_p)
    n = jnp.asarray(embedding_n)
    dis = jnp.asarray(triplets_dis)

    emb_itemsize = a.dtype.itemsize

    if tile_b is None:
        # ~2 MiB per streamed embedding tile (x3 inputs, x2 double-buffering
        # => ~12 MiB pipeline VMEM) — large enough that the ~0.35 us per-step
        # overhead is negligible, small enough for v7x's 48 MiB scoped limit.
        target_tile_bytes = 2 << 20
        rows = max(8, target_tile_bytes // max(1, dim * emb_itemsize))
        tile_b = (rows // 8) * 8
    # Never bigger than one core's share of the batch (rounded to sublanes).
    per_core_rows = _round_up(max(_cdiv(batch, _NUM_CORE_SPLITS), 1), 8)
    tile_b = int(max(8, min(_round_up(int(tile_b), 8), per_core_rows)))

    steps_total = _cdiv(batch, tile_b)
    steps_per_core = _cdiv(steps_total, _NUM_CORE_SPLITS)
    grid = (_NUM_CORE_SPLITS, steps_per_core)
    last_block = steps_total - 1

    def block_index(c, i):
        # Clamp so the core-split overshoot never issues an OOB block DMA;
        # the in-kernel row mask zeroes any re-read / ragged rows.
        return (jnp.minimum(c * steps_per_core + i, last_block), 0)

    emb_spec = pl.BlockSpec((tile_b, dim), block_index)
    dis_spec = pl.BlockSpec((tile_b, 2), block_index)
    # Disjoint per-core output blocks (lane-dense (8,128) tile each).
    out_spec = pl.BlockSpec((1, 8, 128), lambda c, i: (c, 0, 0))

    partials = pl.pallas_call(
        _make_loss_kernel(batch, tile_b, steps_per_core),
        out_shape=jax.ShapeDtypeStruct((_NUM_CORE_SPLITS, 8, 128), jnp.float32),
        grid=grid,
        in_specs=[emb_spec, emb_spec, emb_spec, dis_spec],
        out_specs=out_spec,
        scratch_shapes=[pltpu.SMEM((1,), jnp.float32)],
        compiler_params=pltpu.CompilerParams(
            dimension_semantics=("parallel", "arbitrary"),
            vmem_limit_bytes=_vmem_limit_bytes(),
        ),
    )(a, p, n, dis)

    return jnp.sum(partials[:, 0, 0]) / batch


def _reference(embedding_a, embedding_p, embedding_n, triplets_dis):
    """Pure-JAX reference mirroring the PyTorch forward loop (f32 math)."""
    a = embedding_a.astype(jnp.float32)
    p = embedding_p.astype(jnp.float32)
    n = embedding_n.astype(jnp.float32)
    dis = triplets_dis.astype(jnp.float32)
    d_ap = jnp.sqrt(jnp.sum((a - p + _PAIRDIST_EPS) ** 2, axis=-1))
    d_an = jnp.sqrt(jnp.sum((a - n + _PAIRDIST_EPS) ** 2, axis=-1))
    v_ap = jnp.exp(-d_ap)
    v_an = jnp.exp(-d_an)
    t_ap = jnp.exp(-dis[:, 0])
    t_an = jnp.exp(-dis[:, 1])
    loss = t_ap * (t_ap - v_ap) ** 2 + t_an * (t_an - v_an) ** 2
    return jnp.mean(loss)


if __name__ == "__main__":
    key = jax.random.PRNGKey(0)

    # Case 1: the shipped tiny shape (B=8, D=32) -> single step per core.
    # Case 2: B=100, f32, tile_b=32 -> multi-step tiled reduction with a
    #         ragged, masked last tile (no jnp.pad path).
    # Case 3: B=100, bf16 embeddings -> native-dtype streaming + f32 in-kernel math.
    cases = (
        (8, 32, jnp.float32, None),
        (100, 32, jnp.float32, 32),
        (100, 32, jnp.bfloat16, None),
    )
    for train_batch, emb_dim, dtype, tile_b in cases:
        k_a, k_p, k_n, k_d, key = jax.random.split(key, 5)
        embedding_a = jax.random.normal(
            k_a, (train_batch, emb_dim), dtype=jnp.float32).astype(dtype)
        embedding_p = jax.random.normal(
            k_p, (train_batch, emb_dim), dtype=jnp.float32).astype(dtype)
        embedding_n = jax.random.normal(
            k_n, (train_batch, emb_dim), dtype=jnp.float32).astype(dtype)
        # Deterministic stand-in for np.load(config['path_triplets_truth'])[batch_index]
        triplets_dis = jax.random.uniform(
            k_d, (train_batch, 2), dtype=jnp.float32, minval=0.0, maxval=2.0
        )

        got = loss_fun(embedding_a, embedding_p, embedding_n, triplets_dis,
                       tile_b=tile_b)
        got = jax.block_until_ready(got)
        ref = _reference(embedding_a, embedding_p, embedding_n, triplets_dis)
        assert jnp.isfinite(got), (train_batch, dtype, got)
        assert jnp.allclose(got, ref, rtol=1e-5, atol=1e-5), \
            (train_batch, dtype, got, ref)

    print("KERNEL_OK")
</pallas_src>

<mosaic_0001>
module attributes {stable_mosaic.version = 11 : i64} {
  func.func @kernel(%arg0: i32, %arg1: i32, %arg2: memref<8x32xf32, #tpu.memory_space<vmem>>, %arg3: memref<8x32xf32, #tpu.memory_space<vmem>>, %arg4: memref<8x32xf32, #tpu.memory_space<vmem>>, %arg5: memref<8x2xf32, #tpu.memory_space<vmem>>, %arg6: memref<1x8x128xf32, #tpu.memory_space<vmem>>, %arg7: memref<1xf32, #tpu.memory_space<smem>>) attributes {dimension_semantics = [#tpu.dimension_semantics<parallel>, #tpu.dimension_semantics<arbitrary>], iteration_bounds = array<i64: 2, 1>, scalar_prefetch = 0 : i64, scratch_operands = 1 : i64, tpu.core_type = #tpu.core_type<tc>, window_params = [{transform_indices = @transform_0, window_bounds = array<i64: 8, 32>}, {transform_indices = @transform_1, window_bounds = array<i64: 8, 32>}, {transform_indices = @transform_2, window_bounds = array<i64: 8, 32>}, {transform_indices = @transform_3, window_bounds = array<i64: 8, 2>}, {transform_indices = @transform_4, window_bounds = array<i64: 1, 8, 128>}]} {
    %c0_i32 = arith.constant 0 : i32
    %0 = arith.cmpi eq, %arg1, %c0_i32 : i32
    %1 = arith.extui %0 : i1 to i32
    %c0_i32_0 = arith.constant 0 : i32
    %2 = arith.cmpi ne, %1, %c0_i32_0 : i32
    scf.if %2 {
      %cst_22 = arith.constant 0.000000e+00 : f32
      %c0_23 = arith.constant 0 : index
      %62 = memref.load %arg7[%c0_23] : memref<1xf32, #tpu.memory_space<smem>>
      memref.store %cst_22, %arg7[%c0_23] : memref<1xf32, #tpu.memory_space<smem>>
    } else {
    }
    %c0 = arith.constant 0 : index
    %c0_1 = arith.constant 0 : index
    %3 = vector.load %arg2[%c0, %c0_1] : memref<8x32xf32, #tpu.memory_space<vmem>>, vector<8x32xf32>
    %c0_2 = arith.constant 0 : index
    %c0_3 = arith.constant 0 : index
    %4 = vector.load %arg3[%c0_2, %c0_3] : memref<8x32xf32, #tpu.memory_space<vmem>>, vector<8x32xf32>
    %c0_4 = arith.constant 0 : index
    %c0_5 = arith.constant 0 : index
    %5 = vector.load %arg4[%c0_4, %c0_5] : memref<8x32xf32, #tpu.memory_space<vmem>>, vector<8x32xf32>
    %c0_6 = arith.constant 0 : index
    %c0_7 = arith.constant 0 : index
    %6 = vector.load %arg5[%c0_6, %c0_7] : memref<8x2xf32, #tpu.memory_space<vmem>>, vector<8x2xf32>
    %7 = arith.subf %3, %4 : vector<8x32xf32>
    %cst = arith.constant 9.99999997E-7 : f32
    %8 = vector.broadcast %cst : f32 to vector<8x32xf32>
    %9 = arith.addf %7, %8 : vector<8x32xf32>
    %10 = arith.mulf %9, %9 : vector<8x32xf32>
    %cst_8 = arith.constant dense<0.000000e+00> : vector<8xf32>
    %11 = vector.multi_reduction <add>, %10, %cst_8 [1] : vector<8x32xf32> to vector<8xf32>
    %12 = vector.shape_cast %11 : vector<8xf32> to vector<8x1xf32>
    %13 = math.sqrt %12 : vector<8x1xf32>
    %14 = arith.subf %3, %5 : vector<8x32xf32>
    %cst_9 = arith.constant 9.99999997E-7 : f32
    %15 = vector.broadcast %cst_9 : f32 to vector<8x32xf32>
    %16 = arith.addf %14, %15 : vector<8x32xf32>
    %17 = arith.mulf %16, %16 : vector<8x32xf32>
    %cst_10 = arith.constant dense<0.000000e+00> : vector<8xf32>
    %18 = vector.multi_reduction <add>, %17, %cst_10 [1] : vector<8x32xf32> to vector<8xf32>
    %19 = vector.shape_cast %18 : vector<8xf32> to vector<8x1xf32>
    %20 = math.sqrt %19 : vector<8x1xf32>
    %cst_11 = arith.constant 0.000000e+00 : f32
    %21 = vector.broadcast %cst_11 : f32 to vector<8x1xf32>
    %22 = arith.subf %21, %13 : vector<8x1xf32>
    %23 = math.exp %22 : vector<8x1xf32>
    %cst_12 = arith.constant 0.000000e+00 : f32
    %24 = vector.broadcast %cst_12 : f32 to vector<8x1xf32>
    %25 = arith.subf %24, %20 : vector<8x1xf32>
    %26 = math.exp %25 : vector<8x1xf32>
    %27 = vector.extract_strided_slice %6 {offsets = [0, 0], sizes = [8, 1], strides = [1, 1]} : vector<8x2xf32> to vector<8x1xf32>
    %cst_13 = arith.constant 0.000000e+00 : f32
    %28 = vector.broadcast %cst_13 : f32 to vector<8x1xf32>
    %29 = arith.subf %28, %27 : vector<8x1xf32>
    %30 = math.exp %29 : vector<8x1xf32>
    %31 = vector.extract_strided_slice %6 {offsets = [0, 1], sizes = [8, 1], strides = [1, 1]} : vector<8x2xf32> to vector<8x1xf32>
    %cst_14 = arith.constant 0.000000e+00 : f32
    %32 = vector.broadcast %cst_14 : f32 to vector<8x1xf32>
    %33 = arith.subf %32, %31 : vector<8x1xf32>
    %34 = math.exp %33 : vector<8x1xf32>
    %35 = arith.subf %30, %23 : vector<8x1xf32>
    %36 = arith.mulf %35, %35 : vector<8x1xf32>
    %37 = arith.mulf %30, %36 : vector<8x1xf32>
    %38 = arith.subf %34, %26 : vector<8x1xf32>
    %39 = arith.mulf %38, %38 : vector<8x1xf32>
    %40 = arith.mulf %34, %39 : vector<8x1xf32>
    %41 = arith.addf %37, %40 : vector<8x1xf32>
    %c1_i32 = arith.constant 1 : i32
    %42 = arith.muli %arg0, %c1_i32 : i32
    %43 = arith.addi %42, %arg1 : i32
    %c8_i32 = arith.constant 8 : i32
    %44 = arith.muli %43, %c8_i32 : i32
    %45 = tpu.iota {dimensions = array<i32: 0>} : vector<8x1xi32>
    %46 = vector.broadcast %44 : i32 to vector<8x1xi32>
    %47 = arith.addi %46, %45 : vector<8x1xi32>
    %c8_i32_15 = arith.constant 8 : i32
    %48 = vector.broadcast %c8_i32_15 : i32 to vector<8x1xi32>
    %49 = arith.cmpi slt, %47, %48 : vector<8x1xi32>
    %cst_16 = arith.constant 0.000000e+00 : f32
    %50 = vector.broadcast %cst_16 : f32 to vector<8x1xf32>
    %51 = arith.select %49, %41, %50 : vector<8x1xi1>, vector<8x1xf32>
    %c0_17 = arith.constant 0 : index
    %52 = memref.load %arg7[%c0_17] : memref<1xf32, #tpu.memory_space<smem>>
    %53 = vector.shape_cast %51 : vector<8x1xf32> to vector<1x8x1xf32>
    %cst_18 = arith.constant dense<0.000000e+00> : vector<1xf32>
    %54 = vector.multi_reduction <add>, %53, %cst_18 [1, 2] : vector<1x8x1xf32> to vector<1xf32>
    %55 = vector.shape_cast %54 : vector<1xf32> to vector<1x1x1xf32>
    %56 = vector.extract %55[0, 0, 0] : f32 from vector<1x1x1xf32>
    %57 = arith.addf %52, %56 : f32
    %c0_19 = arith.constant 0 : index
    %58 = memref.load %arg7[%c0_19] : memref<1xf32, #tpu.memory_space<smem>>
    memref.store %57, %arg7[%c0_19] : memref<1xf32, #tpu.memory_space<smem>>
    %c0_i32_20 = arith.constant 0 : i32
    %59 = arith.cmpi eq, %arg1, %c0_i32_20 : i32
    %60 = arith.extui %59 : i1 to i32
    %c0_i32_21 = arith.constant 0 : i32
    %61 = arith.cmpi ne, %60, %c0_i32_21 : i32
    scf.if %61 {
      %c0_22 = arith.constant 0 : index
      %62 = memref.load %arg7[%c0_22] : memref<1xf32, #tpu.memory_space<smem>>
      %63 = vector.broadcast %62 : f32 to vector<1x8x128xf32>
      %c0_23 = arith.constant 0 : index
      %c0_24 = arith.constant 0 : index
      %c0_25 = arith.constant 0 : index
      %64 = vector.load %arg6[%c0_23, %c0_24, %c0_25] : memref<1x8x128xf32, #tpu.memory_space<vmem>>, vector<1x8x128xf32>
      tpu.vector_store %arg6[%c0_23, %c0_24, %c0_25], %63 {strides = array<i32>} : memref<1x8x128xf32, #tpu.memory_space<vmem>>, vector<1x8x128xf32>,
    } else {
    }
    return
  }
  func.func @transform_0(%arg0: i32, %arg1: i32) -> (i32, i32) {
    %c1_i32 = arith.constant 1 : i32
    %0 = arith.muli %arg0, %c1_i32 : i32
    %1 = arith.addi %0, %arg1 : i32
    %c0_i32 = arith.constant 0 : i32
    %2 = arith.minsi %1, %c0_i32 : i32
    %c0_i32_0 = arith.constant 0 : i32
    %c0_i32_1 = arith.constant 0 : i32
    return %2, %c0_i32_0 : i32, i32
  }
  func.func @transform_1(%arg0: i32, %arg1: i32) -> (i32, i32) {
    %c1_i32 = arith.constant 1 : i32
    %0 = arith.muli %arg0, %c1_i32 : i32
    %1 = arith.addi %0, %arg1 : i32
    %c0_i32 = arith.constant 0 : i32
    %2 = arith.minsi %1, %c0_i32 : i32
    %c0_i32_0 = arith.constant 0 : i32
    %c0_i32_1 = arith.constant 0 : i32
    return %2, %c0_i32_0 : i32, i32
  }
  func.func @transform_2(%arg0: i32, %arg1: i32) -> (i32, i32) {
    %c1_i32 = arith.constant 1 : i32
    %0 = arith.muli %arg0, %c1_i32 : i32
    %1 = arith.addi %0, %arg1 : i32
    %c0_i32 = arith.constant 0 : i32
    %2 = arith.minsi %1, %c0_i32 : i32
    %c0_i32_0 = arith.constant 0 : i32
    %c0_i32_1 = arith.constant 0 : i32
    return %2, %c0_i32_0 : i32, i32
  }
  func.func @transform_3(%arg0: i32, %arg1: i32) -> (i32, i32) {
    %c1_i32 = arith.constant 1 : i32
    %0 = arith.muli %arg0, %c1_i32 : i32
    %1 = arith.addi %0, %arg1 : i32
    %c0_i32 = arith.constant 0 : i32
    %2 = arith.minsi %1, %c0_i32 : i32
    %c0_i32_0 = arith.constant 0 : i32
    %c0_i32_1 = arith.constant 0 : i32
    return %2, %c0_i32_0 : i32, i32
  }
  func.func @transform_4(%arg0: i32, %arg1: i32) -> (i32, i32, i32) {
    %c0_i32 = arith.constant 0 : i32
    %c0_i32_0 = arith.constant 0 : i32
    %c0_i32_1 = arith.constant 0 : i32
    return %arg0, %c0_i32, %c0_i32_0 : i32, i32, i32
  }
}

</mosaic_0001>

<llo_original>
// kernel: tpu_custom_call.1
$region0: #{tpu_custom_call.1}
  #allocation0 [shape = 'u32[]', space=smem, size = 0x4, offset = 0x4, fixed_abs, tag = 'smem constant byte address 0x4 - core index']
  #allocation1 [shape = 'u32[72,128]{1,0:T(1,128)}', space=vmem, size = 0x9000, scoped, tag = 'internal scratch']
  #allocation2 [shape = 'f32[1]{0:T(128)}', space=smem, size = 0x200, scoped, tag = 'scratch operand']
  %s0 = inlined_call_operand.vmem [shape: f32[8,32], index: 0, kind: input, shape index: {}]
  %s1 = inlined_call_operand.hbm [shape: f32[8,32], index: 1, kind: input, shape index: {}]
  %s2 = inlined_call_operand.hbm [shape: f32[8,32], index: 2, kind: input, shape index: {}]
  %s3 = inlined_call_operand.vmem [shape: f32[8,2], index: 3, kind: input, shape index: {}]
  %s4 = inlined_call_operand.hbm [shape: f32[2,8,128], index: 4, kind: output, shape index: {}]
  %s5 = sld [smem:[#allocation0]]
  $region65: #{tpu_custom_call.1} parent=0
    _
  %s7 = ssub.s32 1, %s5
  %s8 = scalar_select 0, %s7, %s5
  $region1: #{tpu_custom_call.1} parent=0
    #allocation3 [shape = 'u8[8192]{0}', space=vmem, size = 0x2000, scoped, tag = 'input window, operand 1']
    #allocation4 [shape = 's32[2]{0}', space=sflag, size = 0x8, scoped, tag = 'scoped memory for tpu_custom_call.1']
    #allocation5 [shape = 's32[2]{0}', space=sflag, size = 0x8, scoped, tag = 'scoped memory for tpu_custom_call.1']
    #allocation6 [shape = 'u8[8192]{0}', space=vmem, size = 0x2000, scoped, tag = 'input window, operand 2']
    #allocation7 [shape = 's32[2]{0}', space=sflag, size = 0x8, scoped, tag = 'scoped memory for tpu_custom_call.1']
    #allocation8 [shape = 'u8[8192]{0}', space=vmem, size = 0x2000, scoped, tag = 'output window, operand 0']
    %9 = vsyncpa [#allocation4], 0
    %s10 = scalar_lea.sflag [#allocation4], 1
    %11 = vsyncpa %s10, 0
    %12 = vsyncpa [#allocation7], 0
    %s13 = scalar_lea.sflag [#allocation7], 1
    %14 = vsyncpa %s13, 0
    %15 = vsyncpa [#allocation5], 0
    %s16 = scalar_lea.sflag [#allocation5], 1
    %17 = vsyncpa %s16, 0
    loop: start=0, step=1, limit=4
    $region2: #{tpu_custom_call.1} parent=1 // loop_pre_header
      _
    $region3: #{tpu_custom_call.1} parent=1 // loop_header
      %s19 = sphi 0, %s23
      %p20 = scmp.ge.s32.totalorder %s19, 4
      %s26 = sphi 0, %s38
      %s27 = sphi 0, %s34
      %s28 = sphi 0, %s26
      %s29 = sphi 0, %s27
      %s30 = sphi 0, %s28
      %s31 = sphi 0, %s29
      %s47 = sphi 0, %s49
      %s50 = sphi 0, %s47
      %s51 = sphi 0, %s50
      %s67 = sphi 0, %s51
      %s79 = sphi 0, %s81
      %s82 = sphi 0, %s79
      %s83 = sphi 0, %s82
      %s99 = sphi 0, %s83
      %s111 = sphi 0, %s113
      %s114 = sphi 0, %s111
      %s115 = sphi 0, %s114
      %s131 = sphi 0, %s115
      %s143 = sphi 0, %s145
      %s146 = sphi 0, %s143
      %s147 = sphi 0, %s146
      %s163 = sphi 0, %s147
      %s169 = sphi 0, %s171
      %s172 = sphi 0, %s169
      %s173 = sphi 0, %s172
      %s189 = sphi 0, %s173
    $region4: #{tpu_custom_call.1} parent=1 // loop_header_branch
      %22 = sbr.rel (%p20) target = $region8
    $region5: #{tpu_custom_call.1} parent=1 // loop_body
      %s24 = ssub.s32 %s19, 1
      %s25 = ssub.s32 %s19, 2
      %s32 = sadd.s32 1, %s27
      %p33 = scmp.ge.s32.totalorder %s32, 1
      %s34 = scalar_select %p33, 0, %s32
      %s35 = sadd.s32 1, %s26
      %s36 = scalar_select %p33, %s35, %s26
      %p37 = scmp.ge.s32.totalorder %s36, 2
      %s38 = scalar_select %p37, 0, %s36
      %s39 = sadd.s32 %s26, %s27
      %p40 = scmp.lt.s32.totalorder %s39, 0
      %s41 = scalar_select %p40, %s39, 0
      %s42 = sadd.s32 %s38, %s34
      %p43 = scmp.lt.s32.totalorder %s42, 0
      %s44 = scalar_select %p43, %s42, 0
      %s45 = ssub.s32 %s41, %s44
      %p46 = scmp.eq.s32.totalorder %s45, 0
      %s48 = sadd.s32 %s47, 1
      %s49 = scalar_select %p46, %s47, %s48
      %p52 = pneg %p46
      %p53 = scmp.eq.s32.totalorder %s19, 1
      %p54 = por %p52, %p53
      %p55 = scmp.ne.s32.totalorder %s47, %s50
      %p56 = scmp.eq.s32.totalorder %s19, 0
      %p57 = por %p55, %p56
      %p58 = scmp.ne.s32.totalorder %s47, %s50
      %p59 = scmp.eq.s32.totalorder %s24, 1
      %p60 = por %p58, %p59
      %p61 = scmp.ne.s32.totalorder %s50, %s51
      %p62 = scmp.eq.s32.totalorder %s24, 0
      %p63 = por %p61, %p62
      %p64 = scmp.ne.s32.totalorder %s50, %s51
      %p65 = scmp.eq.s32.totalorder %s25, 1
      %p66 = por %p64, %p65
      %p68 = scmp.ne.s32.totalorder %s51, %s67
      %p69 = scmp.eq.s32.totalorder %s25, 0
      %p70 = por %p68, %p69
      %s71 = sadd.s32 %s26, %s27
      %p72 = scmp.lt.s32.totalorder %s71, 0
      %s73 = scalar_select %p72, %s71, 0
      %s74 = sadd.s32 %s38, %s34
      %p75 = scmp.lt.s32.totalorder %s74, 0
      %s76 = scalar_select %p75, %s74, 0
      %s77 = ssub.s32 %s73, %s76
      %p78 = scmp.eq.s32.totalorder %s77, 0
      %s80 = sadd.s32 %s79, 1
      %s81 = scalar_select %p78, %s79, %s80
      %p84 = pneg %p78
      %p85 = scmp.eq.s32.totalorder %s19, 1
      %p86 = por %p84, %p85
      %p87 = scmp.ne.s32.totalorder %s79, %s82
      %p88 = scmp.eq.s32.totalorder %s19, 0
      %p89 = por %p87, %p88
      %p90 = scmp.ne.s32.totalorder %s79, %s82
      %p91 = scmp.eq.s32.totalorder %s24, 1
      %p92 = por %p90, %p91
      %p93 = scmp.ne.s32.totalorder %s82, %s83
      %p94 = scmp.eq.s32.totalorder %s24, 0
      %p95 = por %p93, %p94
      %p96 = scmp.ne.s32.totalorder %s82, %s83
      %p97 = scmp.eq.s32.totalorder %s25, 1
      %p98 = por %p96, %p97
      %p100 = scmp.ne.s32.totalorder %s83, %s99
      %p101 = scmp.eq.s32.totalorder %s25, 0
      %p102 = por %p100, %p101
      %s103 = sadd.s32 %s26, %s27
      %p104 = scmp.lt.s32.totalorder %s103, 0
      %s105 = scalar_select %p104, %s103, 0
      %s106 = sadd.s32 %s38, %s34
      %p107 = scmp.lt.s32.totalorder %s106, 0
      %s108 = scalar_select %p107, %s106, 0
      %s109 = ssub.s32 %s105, %s108
      %p110 = scmp.eq.s32.totalorder %s109, 0
      %s112 = sadd.s32 %s111, 1
      %s113 = scalar_select %p110, %s111, %s112
      %p116 = pneg %p110
      %p117 = scmp.eq.s32.totalorder %s19, 1
      %p118 = por %p116, %p117
      %p119 = scmp.ne.s32.totalorder %s111, %s114
      %p120 = scmp.eq.s32.totalorder %s19, 0
      %p121 = por %p119, %p120
      %p122 = scmp.ne.s32.totalorder %s111, %s114
      %p123 = scmp.eq.s32.totalorder %s24, 1
      %p124 = por %p122, %p123
      %p125 = scmp.ne.s32.totalorder %s114, %s115
      %p126 = scmp.eq.s32.totalorder %s24, 0
      %p127 = por %p125, %p126
      %p128 = scmp.ne.s32.totalorder %s114, %s115
      %p129 = scmp.eq.s32.totalorder %s25, 1
      %p130 = por %p128, %p129
      %p132 = scmp.ne.s32.totalorder %s115, %s131
      %p133 = scmp.eq.s32.totalorder %s25, 0
      %p134 = por %p132, %p133
      %s135 = sadd.s32 %s26, %s27
      %p136 = scmp.lt.s32.totalorder %s135, 0
      %s137 = scalar_select %p136, %s135, 0
      %s138 = sadd.s32 %s38, %s34
      %p139 = scmp.lt.s32.totalorder %s138, 0
      %s140 = scalar_select %p139, %s138, 0
      %s141 = ssub.s32 %s137, %s140
      %p142 = scmp.eq.s32.totalorder %s141, 0
      %s144 = sadd.s32 %s143, 1
      %s145 = scalar_select %p142, %s143, %s144
      %p148 = pneg %p142
      %p149 = scmp.eq.s32.totalorder %s19, 1
      %p150 = por %p148, %p149
      %p151 = scmp.ne.s32.totalorder %s143, %s146
      %p152 = scmp.eq.s32.totalorder %s19, 0
      %p153 = por %p151, %p152
      %p154 = scmp.ne.s32.totalorder %s143, %s146
      %p155 = scmp.eq.s32.totalorder %s24, 1
      %p156 = por %p154, %p155
      %p157 = scmp.ne.s32.totalorder %s146, %s147
      %p158 = scmp.eq.s32.totalorder %s24, 0
      %p159 = por %p157, %p158
      %p160 = scmp.ne.s32.totalorder %s146, %s147
      %p161 = scmp.eq.s32.totalorder %s25, 1
      %p162 = por %p160, %p161
      %p164 = scmp.ne.s32.totalorder %s147, %s163
      %p165 = scmp.eq.s32.totalorder %s25, 0
      %p166 = por %p164, %p165
      %s167 = ssub.s32 %s26, %s38
      %p168 = scmp.eq.s32.totalorder %s167, 0
      %s170 = sadd.s32 %s169, 1
      %s171 = scalar_select %p168, %s169, %s170
      %p174 = pneg %p168
      %p175 = scmp.eq.s32.totalorder %s19, 1
      %p176 = por %p174, %p175
      %p177 = scmp.ne.s32.totalorder %s169, %s172
      %p178 = scmp.eq.s32.totalorder %s19, 0
      %p179 = por %p177, %p178
      %p180 = scmp.ne.s32.totalorder %s169, %s172
      %p181 = scmp.eq.s32.totalorder %s24, 1
      %p182 = por %p180, %p181
      %p183 = scmp.ne.s32.totalorder %s172, %s173
      %p184 = scmp.eq.s32.totalorder %s24, 0
      %p185 = por %p183, %p184
      %p186 = scmp.ne.s32.totalorder %s172, %s173
      %p187 = scmp.eq.s32.totalorder %s25, 1
      %p188 = por %p186, %p187
      %p190 = scmp.ne.s32.totalorder %s173, %s189
      %p191 = scmp.eq.s32.totalorder %s25, 0
      %p192 = por %p190, %p191
      %p193 = scmp.le.s32.totalorder 1, %s19
      %p194 = scmp.lt.s32.totalorder %s19, 3
      %p195 = pnand %p193, %p194
      %p196 = pneg %p195
      // Predicated region
      $region9: #{tpu_custom_call.1} parent=5 // pred_check
        _
      $region10: #{tpu_custom_call.1} parent=5 // pred_check_branch
        %198 = sbr.rel (%p195) target = $region12
      $region11: #{tpu_custom_call.1} parent=5 // pred_region
        %s199 = ssub.s32 %s19, 1
      $region12: #{tpu_custom_call.1} parent=5 // pred_fallthru
        _
      %p200 = scmp.lt.s32.totalorder %s19, 2
      // Predicated region
      $region13: #{tpu_custom_call.1} parent=5 // pred_check
        %p201 = pneg %p200
      $region14: #{tpu_custom_call.1} parent=5 // pred_check_branch
        %203 = sbr.rel (%p201) target = $region16
      $region15: #{tpu_custom_call.1} parent=5 // pred_region
        // Predicated region
        $region17: #{tpu_custom_call.1} parent=15 // pred_check
          %p204 = pneg %p57
        $region18: #{tpu_custom_call.1} parent=15 // pred_check_branch
          %206 = sbr.rel (%p204) target = $region20
        $region19: #{tpu_custom_call.1} parent=15 // pred_region
          %s207 = sadd.s32 %s26, %s27
          %p208 = scmp.lt.s32.totalorder %s207, 0
          %s209 = scalar_select %p208, %s207, 0
          %p210 = scmp.lt.s32.totalorder %s209, 0
          %s211 = scalar_select %p210, %s209, 0
          %s212 = smul.addr %s211, 8
          %s213 = scalar_lea.vmem %s0, %s212
          %s214 = sadd.s32 %s26, %s27
          %p215 = scmp.lt.s32.totalorder %s214, 0
          %s216 = scalar_select %p215, %s214, 0
        $region20: #{tpu_custom_call.1} parent=15 // pred_fallthru
          _
        // Predicated region
        $region21: #{tpu_custom_call.1} parent=15 // pred_check
          %p217 = pneg %p89
        $region22: #{tpu_custom_call.1} parent=15 // pred_check_branch
          %219 = sbr.rel (%p217) target = $region24
        $region23: #{tpu_custom_call.1} parent=15 // pred_region
          %s220 = sand.u32 %s79, 1
          %s221 = scalar_lea.sflag [#allocation4], %s220
          %s222 = sand.u32 %s79, 1
          %s223 = smul.addr %s222, 8
          %s224 = scalar_lea.vmem [#allocation3], %s223
          %s225 = sadd.s32 %s26, %s27
          %p226 = scmp.lt.s32.totalorder %s225, 0
          %s227 = scalar_select %p226, %s225, 0
          %229 = vsyncadd %s221, 0
          %s230 = smul.addr %s227, 8
          %s231 = scalar_lea.hbm %s1, %s230
          %s233 = sshll.u32 %s231, 4
          %s234 = int_to_ptr.hbm [resolvable:$true] %s233
          %s235 = sshll.u32 %s224, 4
          %s236 = int_to_ptr.vmem [resolvable:$true] %s235
          %238 = dma.hbm_to_vmem [thread:$0]  %s234, 128, %s236, %s221
        $region24: #{tpu_custom_call.1} parent=15 // pred_fallthru
          _
        // Predicated region
        $region25: #{tpu_custom_call.1} parent=15 // pred_check
          %p239 = pneg %p121
        $region26: #{tpu_custom_call.1} parent=15 // pred_check_branch
          %241 = sbr.rel (%p239) target = $region28
        $region27: #{tpu_custom_call.1} parent=15 // pred_region
          %s242 = sand.u32 %s111, 1
          %s243 = scalar_lea.sflag [#allocation7], %s242
          %s244 = sand.u32 %s111, 1
          %s245 = smul.addr %s244, 8
          %s246 = scalar_lea.vmem [#allocation6], %s245
          %s247 = sadd.s32 %s26, %s27
          %p248 = scmp.lt.s32.totalorder %s247, 0
          %s249 = scalar_select %p248, %s247, 0
          %251 = vsyncadd %s243, 0
          %s252 = smul.addr %s249, 8
          %s253 = scalar_lea.hbm %s2, %s252
          %s255 = sshll.u32 %s253, 4
          %s256 = int_to_ptr.hbm [resolvable:$true] %s255
          %s257 = sshll.u32 %s246, 4
          %s258 = int_to_ptr.vmem [resolvable:$true] %s257
          %260 = dma.hbm_to_vmem [thread:$0]  %s256, 128, %s258, %s243
        $region28: #{tpu_custom_call.1} parent=15 // pred_fallthru
          _
        // Predicated region
        $region29: #{tpu_custom_call.1} parent=15 // pred_check
          %p261 = pneg %p153
        $region30: #{tpu_custom_call.1} parent=15 // pred_check_branch
          %263 = sbr.rel (%p261) target = $region32
        $region31: #{tpu_custom_call.1} parent=15 // pred_region
          %s264 = sadd.s32 %s26, %s27
          %p265 = scmp.lt.s32.totalorder %s264, 0
          %s266 = scalar_select %p265, %s264, 0
          %p267 = scmp.lt.s32.totalorder %s266, 0
          %s268 = scalar_select %p267, %s266, 0
          %s269 = smul.addr %s268, 8
          %s270 = scalar_lea.vmem %s3, %s269
          %s271 = sadd.s32 %s26, %s27
          %p272 = scmp.lt.s32.totalorder %s271, 0
          %s273 = scalar_select %p272, %s271, 0
        $region32: #{tpu_custom_call.1} parent=15 // pred_fallthru
          _
      $region16: #{tpu_custom_call.1} parent=5 // pred_fallthru
        _
      %p274 = scmp.le.s32.totalorder 1, %s19
      %p275 = scmp.lt.s32.totalorder %s19, 3
      %p276 = pnand %p274, %p275
      %p277 = pneg %p276
      // Predicated region
      $region33: #{tpu_custom_call.1} parent=5 // pred_check
        _
      $region34: #{tpu_custom_call.1} parent=5 // pred_check_branch
        %279 = sbr.rel (%p276) target = $region36
      $region35: #{tpu_custom_call.1} parent=5 // pred_region
        %s280 = ssub.s32 %s19, 1
        %s281 = sand.u32 %s82, 1
        %s282 = scalar_lea.sflag [#allocation4], %s281
        %s283 = sand.u32 %s82, 1
        %s284 = smul.addr %s283, 8
        %s285 = scalar_lea.vmem [#allocation3], %s284
        // Predicated region
        $region37: #{tpu_custom_call.1} parent=35 // pred_check
          %p286 = pneg %p95
        $region38: #{tpu_custom_call.1} parent=35 // pred_check_branch
          %288 = sbr.rel (%p286) target = $region40
        $region39: #{tpu_custom_call.1} parent=35 // pred_region
          %290 = dma.done %s282, 128
        $region40: #{tpu_custom_call.1} parent=35 // pred_fallthru
          _
        %s291 = sand.u32 %s114, 1
        %s292 = scalar_lea.sflag [#allocation7], %s291
        %s293 = sand.u32 %s114, 1
        %s294 = smul.addr %s293, 8
        %s295 = scalar_lea.vmem [#allocation6], %s294
        // Predicated region
        $region41: #{tpu_custom_call.1} parent=35 // pred_check
          %p296 = pneg %p127
        $region42: #{tpu_custom_call.1} parent=35 // pred_check_branch
          %298 = sbr.rel (%p296) target = $region44
        $region43: #{tpu_custom_call.1} parent=35 // pred_region
          %300 = dma.done %s292, 128
        $region44: #{tpu_custom_call.1} parent=35 // pred_fallthru
          _
        %s301 = sadd.s32 %s28, %s29
        %p302 = scmp.lt.s32.totalorder %s301, 0
        %s303 = scalar_select %p302, %s301, 0
        %p304 = scmp.lt.s32.totalorder %s303, 0
        %s305 = scalar_select %p304, %s303, 0
        %s306 = smul.addr %s305, 8
        %s307 = scalar_lea.vmem %s0, %s306
        %p308 = pneg %p63
        %p309 = pneg %p60
        %s310 = sand.u32 %s82, 1
        %s311 = scalar_lea.sflag [#allocation4], %s310
        %s312 = sand.u32 %s82, 1
        %s313 = smul.addr %s312, 8
        %s314 = scalar_lea.vmem [#allocation3], %s313
        %p315 = pneg %p95
        %p316 = pneg %p92
        %s317 = sand.u32 %s114, 1
        %s318 = scalar_lea.sflag [#allocation7], %s317
        %s319 = sand.u32 %s114, 1
        %s320 = smul.addr %s319, 8
        %s321 = scalar_lea.vmem [#allocation6], %s320
        %p322 = pneg %p127
        %p323 = pneg %p124
        %s324 = sadd.s32 %s28, %s29
        %p325 = scmp.lt.s32.totalorder %s324, 0
        %s326 = scalar_select %p325, %s324, 0
        %p327 = scmp.lt.s32.totalorder %s326, 0
        %s328 = scalar_select %p327, %s326, 0
        %s329 = smul.addr %s328, 8
        %s330 = scalar_lea.vmem %s3, %s329
        %p331 = pneg %p159
        %p332 = pneg %p156
        %p333 = pneg %p185
        %p334 = pneg %p182
        %s335 = sand.u32 %s172, 1
        %s336 = scalar_lea.sflag [#allocation5], %s335
        %s337 = sand.u32 %s172, 1
        %s338 = smul.addr %s337, 8
        %s339 = scalar_lea.vmem [#allocation8], %s338
        %s340 = sadd.s32 %s28, %s29
        %p341 = scmp.lt.s32.totalorder %s340, 0
        %s342 = scalar_select %p341, %s340, 0
        %p343 = scmp.lt.s32.totalorder %s342, 0
        %s344 = scalar_select %p343, %s342, 0
        %s345 = smul.addr %s344, 8
        %s346 = scalar_lea.vmem %s0, %s345
        %s347 = sadd.s32 %s28, %s29
        %p348 = scmp.lt.s32.totalorder %s347, 0
        %s349 = scalar_select %p348, %s347, 0
        %s350 = sadd.s32 %s28, %s29
        %p351 = scmp.lt.s32.totalorder %s350, 0
        %s352 = scalar_select %p351, %s350, 0
        %s353 = sadd.s32 %s28, %s29
        %p354 = scmp.lt.s32.totalorder %s353, 0
        %s355 = scalar_select %p354, %s353, 0
        %s356 = sadd.s32 %s28, %s29
        %p357 = scmp.lt.s32.totalorder %s356, 0
        %s358 = scalar_select %p357, %s356, 0
        %p359 = scmp.lt.s32.totalorder %s358, 0
        %s360 = scalar_select %p359, %s358, 0
        %s361 = smul.addr %s360, 8
        %s362 = scalar_lea.vmem %s3, %s361
        %s363 = sadd.s32 %s28, %s29
        %p364 = scmp.lt.s32.totalorder %s363, 0
        %s365 = scalar_select %p364, %s363, 0
        %p366 = scmp.eq.s32.totalorder %s29, 0
        // Predicated region
        $region45: #{tpu_custom_call.1} parent=35 // pred_check
          %p367 = pneg %p366
        $region46: #{tpu_custom_call.1} parent=35 // pred_check_branch
          %369 = sbr.rel (%p367) target = $region48
        $region47: #{tpu_custom_call.1} parent=35 // pred_region
          %s370 = scalar_lea.smem [#allocation2], 0
          %371 = sst [smem:[%s370]] 0.0
        $region48: #{tpu_custom_call.1} parent=35 // pred_fallthru
          _
        %v372 = vld [vmem:[%s346] sm:$0xff]
        %v373 = vld [vmem:[%s285] sm:$0xff]
        %v374 = vld [vmem:[%s295] sm:$0xff]
        %v375 = vld [vmem:[%s362] sm:$0xff]
        %v376 = vsub.f32 %v372, %v373
        %v377 = vadd.f32 %v376, 1e-06
        %v378 = vmul.f32 %v377, %v377
        %vm379 = vcmask 261120
        %v380 = vsel %vm379, %v378, 0.0
        %381 = vadd.xlane.f32.xlu0 %v380
        %v382 = vpop.xlane.xlu0 %381
        %v383 = vrsqrt.pop %v382
        %v384 = vmul.f32 %v383, %v382
        %v385 = vmul.f32 %v384, %v383
        %v386 = vmul.f32 0.5, %v385
        %v387 = vsub.f32 1.5, %v386
        %v388 = vmul.f32 %v383, %v387
        %v389 = vmul.f32 %v382, %v388
        %vm390 = vcmp.eq.f32.partialorder %v382, inf
        %v391 = vsel %vm390, %v382, %v389
        %vm392 = vcmp.eq.f32.partialorder %v382, 0.0
        %v393 = vand.u32 %v382, 2147483648
        %v394 = vsel %vm392, %v393, %v391
        %v395 = vsub.f32 %v372, %v374
        %v396 = vadd.f32 %v395, 1e-06
        %v397 = vmul.f32 %v396, %v396
        %v398 = vsel %vm379, %v397, 0.0
        %399 = vadd.xlane.f32.xlu0 %v398
        %v400 = vpop.xlane.xlu0 %399
        %v401 = vrsqrt.pop %v400
        %v402 = vmul.f32 %v401, %v400
        %v403 = vmul.f32 %v402, %v401
        %v404 = vmul.f32 0.5, %v403
        %v405 = vsub.f32 1.5, %v404
        %v406 = vmul.f32 %v401, %v405
        %v407 = vmul.f32 %v400, %v406
        %vm408 = vcmp.eq.f32.partialorder %v400, inf
        %v409 = vsel %vm408, %v400, %v407
        %vm410 = vcmp.eq.f32.partialorder %v400, 0.0
        %v411 = vand.u32 %v400, 2147483648
        %v412 = vsel %vm410, %v411, %v409
        %v413 = vsub.f32 0.0, %v394
        %v414 = vmul.f32 %v413, 1.442695
        %v415 = vpow.pop %v414
        %v416 = vsub.f32 0.0, %v412
        %v417 = vmul.f32 %v416, 1.442695
        %v418 = vpow.pop %v417
        %v419 = vsub.f32 0.0, %v375
        %v420 = vmul.f32 %v419, 1.442695
        %v421 = vpow.pop %v420
        %v422 = vsub.f32 %v421, %v415
        %v423 = vmul.f32 %v422, %v422
        %v424 = vmul.f32 %v421, %v423
        %v425 = vsub.f32 %v421, %v418
        %v426 = vmul.f32 %v425, %v425
        %v427 = vmul.f32 %v421, %v426
        %429 = vrot.lane.b32.xlu0 %v427, 127
        %v430 = vpop.permute.xlu0 %429
        %v432 = vadd.f32 %v424, %v430
        %s433 = sadd.s32 %s28, %s29
        %s434 = smul.u32 %s433, 8
        %v435 = vlaneseq
        %v436 = vshrl.u32 %v435, 7
        %v437 = vstv %s434
        %v438 = vadd.s32 %v437, %v436
        %vm439 = vcmp.lt.s32.totalorder %v438, 8
        %v440 = vsel %vm439, %v432, 0.0
        %s441 = sld [smem:[#allocation2]]
        %vm442 = vcmask 7168
        %v443 = vsel %vm442, %v440, 0.0
        %444 = vadd.xlane.f32.xlu0 %v443
        %v445 = vpop.xlane.xlu0 %444
        %v446 = vrot.slane %v445, 4
        %v447 = vadd.f32 %v445, %v446
        %v448 = vrot.slane %v447, 2
        %v449 = vadd.f32 %v447, %v448
        %v450 = vrot.slane %v449, 1
        %v451 = vadd.f32 %v449, %v450
        %s452 = vtos %v451
        %s453 = sadd.f32 %s441, %s452
        %s454 = scalar_lea.smem [#allocation2], 0
        %455 = sst [smem:[%s454]] %s453
        // Predicated region
        $region49: #{tpu_custom_call.1} parent=35 // pred_check
          %p456 = pneg %p366
        $region50: #{tpu_custom_call.1} parent=35 // pred_check_branch
          %458 = sbr.rel (%p456) target = $region52
        $region51: #{tpu_custom_call.1} parent=35 // pred_region
          %s459 = sld [smem:[#allocation2]]
          %v460 = vstv %s459
          %461 = vst [vmem:[%s339] sm:$0xff] %v460
        $region52: #{tpu_custom_call.1} parent=35 // pred_fallthru
          _
        %s462 = sand.u32 %s172, 1
        %s463 = scalar_lea.sflag [#allocation5], %s462
        %s464 = sand.u32 %s172, 1
        %s465 = smul.addr %s464, 8
        %s466 = scalar_lea.vmem [#allocation8], %s465
        // Predicated region
        $region53: #{tpu_custom_call.1} parent=35 // pred_check
          %p467 = pneg %p182
        $region54: #{tpu_custom_call.1} parent=35 // pred_check_branch
          %469 = sbr.rel (%p467) target = $region56
        $region55: #{tpu_custom_call.1} parent=35 // pred_region
          %471 = vsyncadd %s463, 0
          %s472 = smul.addr %s28, 8
          %s473 = scalar_lea.hbm %s4, %s472
          %s475 = sshll.u32 %s466, 4
          %s476 = int_to_ptr.vmem [resolvable:$true] %s475
          %s477 = sshll.u32 %s473, 4
          %s478 = int_to_ptr.hbm [resolvable:$true] %s477
          %480 = dma.vmem_to_hbm [thread:$0]  %s476, 128, %s478, %s463
        $region56: #{tpu_custom_call.1} parent=35 // pred_fallthru
          _
      $region36: #{tpu_custom_call.1} parent=5 // pred_fallthru
        _
      %p481 = scmp.le.s32.totalorder 2, %s19
      // Predicated region
      $region57: #{tpu_custom_call.1} parent=5 // pred_check
        %p482 = pneg %p481
      $region58: #{tpu_custom_call.1} parent=5 // pred_check_branch
        %484 = sbr.rel (%p482) target = $region60
      $region59: #{tpu_custom_call.1} parent=5 // pred_region
        %s485 = ssub.s32 %s19, 2
        // Predicated region
        $region61: #{tpu_custom_call.1} parent=59 // pred_check
          %p486 = pneg %p188
        $region62: #{tpu_custom_call.1} parent=59 // pred_check_branch
          %488 = sbr.rel (%p486) target = $region64
        $region63: #{tpu_custom_call.1} parent=59 // pred_region
          %s489 = sand.u32 %s173, 1
          %s490 = scalar_lea.sflag [#allocation5], %s489
          %s491 = sand.u32 %s173, 1
          %s492 = smul.addr %s491, 8
          %s493 = scalar_lea.vmem [#allocation8], %s492
          %495 = dma.done %s490, 128
        $region64: #{tpu_custom_call.1} parent=59 // pred_fallthru
          _
      $region60: #{tpu_custom_call.1} parent=5 // pred_fallthru
        _
    $region6: #{tpu_custom_call.1} parent=1 // loop_footer
      %s23 = sadd.s32 1, %s19
    $region7: #{tpu_custom_call.1} parent=1 // loop_footer_branch
      %18 = sbr.rel target = $region3
    $region8: #{tpu_custom_call.1} parent=1 // loop_exit
      _
    %496 = vsyncpa [#allocation4], 1
    %s497 = scalar_lea.sflag [#allocation4], 1
    %498 = vsyncpa %s497, 1
    %499 = vsyncpa [#allocation7], 1
    %s500 = scalar_lea.sflag [#allocation7], 1
    %501 = vsyncpa %s500, 1
    %502 = vsyncpa [#allocation5], 1
    %s503 = scalar_lea.sflag [#allocation5], 1
    %504 = vsyncpa %s503, 1

</llo_original>
